<compile_context>
chip_gen: v7x
topology: tpu7x:2x2x1
jax: 0.10.0
libtpu: 0.0.40
codegen_flags: <defaults>
</compile_context>

<pallas_src>
import functools

import jax
import jax.numpy as jnp
from jax.experimental import pallas as pl
from jax.experimental.pallas import tpu as pltpu


def _round_up(x, m):
    return (x + m - 1) // m * m


def _actor_kernel(x_ref, w1_ref, b1_ref, w2_ref, b2_ref, w3_ref, b3_ref,
                  o_ref, *, max_action, compute_dtype):
    # MXU matmuls in `compute_dtype` (f32 or bf16), f32 accumulation.
    # All element-wise work (bias add, ReLU, tanh, scale) stays in f32.
    x = x_ref[...].astype(compute_dtype)

    h1 = jnp.dot(x, w1_ref[...], preferred_element_type=jnp.float32)
    h1 = jnp.maximum(h1 + b1_ref[...], 0.0)

    h2 = jnp.dot(h1.astype(compute_dtype), w2_ref[...],
                 preferred_element_type=jnp.float32)
    h2 = jnp.maximum(h2 + b2_ref[...], 0.0)

    h3 = jnp.dot(h2.astype(compute_dtype), w3_ref[...],
                 preferred_element_type=jnp.float32)
    h3 = h3 + b3_ref[...]

    o_ref[...] = (max_action * jnp.tanh(h3)).astype(o_ref.dtype)


def actor_forward(x, params, max_action, *, block_batch=1024,
                  weight_dtype=jnp.float32):
    """x: [batch, state_dim] f32 -> [batch, action_dim] f32."""
    w1, b1, w2, b2, w3, b3 = params
    batch, state_dim = x.shape
    h1 = w1.shape[1]
    h2 = w2.shape[1]
    action_dim = w3.shape[1]

    # ---- lane-align hidden/action dims (exact zero padding) ----------------
    h1p = _round_up(h1, 128)          # 400 -> 512
    h2p = _round_up(h2, 128)          # 300 -> 384
    ap = _round_up(action_dim, 128)   # action_dim -> 128 (lane-dense stores)

    w1p = jnp.zeros((state_dim, h1p), weight_dtype).at[:, :h1].set(
        w1.astype(weight_dtype))
    b1p = jnp.zeros((1, h1p), jnp.float32).at[:, :h1].set(b1)
    w2p = jnp.zeros((h1p, h2p), weight_dtype).at[:h1, :h2].set(
        w2.astype(weight_dtype))
    b2p = jnp.zeros((1, h2p), jnp.float32).at[:, :h2].set(b2)
    w3p = jnp.zeros((h2p, ap), weight_dtype).at[:h2, :action_dim].set(
        w3.astype(weight_dtype))
    b3p = jnp.zeros((1, ap), jnp.float32).at[:, :action_dim].set(b3)

    # ---- batch tiling --------------------------------------------------------
    # At least 8 rows (sublane), multiple of 8; split big batches into >= 2
    # tiles so the "parallel" axis can shard across v7x's two TensorCores.
    block_batch = _round_up(max(int(block_batch), 8), 8)
    half = _round_up(max((batch + 1) // 2, 1), 8)
    tb = max(8, min(block_batch, half))
    bp = _round_up(batch, tb)
    if bp == batch:
        xp = x
    else:
        xp = jnp.zeros((bp, state_dim), x.dtype).at[:batch].set(x)
    grid = (bp // tb,)

    # ---- cost estimate (helps XLA schedule/overlap this custom call) --------
    flops = 2 * bp * (state_dim * h1p + h1p * h2p + h2p * ap)
    bytes_accessed = (
        xp.size * xp.dtype.itemsize
        + sum(a.size * a.dtype.itemsize
              for a in (w1p, b1p, w2p, b2p, w3p, b3p))
        + bp * ap * 4)
    cost = pl.CostEstimate(flops=flops, transcendentals=bp * ap,
                           bytes_accessed=bytes_accessed)

    kernel = functools.partial(_actor_kernel,
                               max_action=float(max_action),
                               compute_dtype=weight_dtype)

    out_padded = pl.pallas_call(
        kernel,
        out_shape=jax.ShapeDtypeStruct((bp, ap), jnp.float32),
        grid=grid,
        in_specs=[
            pl.BlockSpec((tb, state_dim), lambda i: (i, 0)),   # x tile (streamed)
            pl.BlockSpec((state_dim, h1p), lambda i: (0, 0)),  # w1 (VMEM-resident)
            pl.BlockSpec((1, h1p), lambda i: (0, 0)),          # b1
            pl.BlockSpec((h1p, h2p), lambda i: (0, 0)),        # w2
            pl.BlockSpec((1, h2p), lambda i: (0, 0)),          # b2
            pl.BlockSpec((h2p, ap), lambda i: (0, 0)),         # w3
            pl.BlockSpec((1, ap), lambda i: (0, 0)),           # b3
        ],
        out_specs=pl.BlockSpec((tb, ap), lambda i: (i, 0)),
        compiler_params=pltpu.CompilerParams(
            dimension_semantics=("parallel",),
            vmem_limit_bytes=32 * 1024 * 1024),
        cost_estimate=cost,
    )(xp, w1p, b1p, w2p, b2p, w3p, b3p)

    return out_padded[:batch, :action_dim]


# Jitted convenience wrapper: fuses the (tiny) weight/x padding and output
# slicing with the pallas_call, so repeated calls pay no eager-op overhead.
actor_forward_jit = jax.jit(
    actor_forward, static_argnames=("max_action", "block_batch", "weight_dtype"))


def init_actor_params(key, state_dim, action_dim):
    """Deterministic init mimicking PyTorch nn.Linear default
    (uniform(-1/sqrt(fan_in), 1/sqrt(fan_in)))."""
    def linear(key, fan_in, fan_out):
        kw, kb = jax.random.split(key)
        bound = 1.0 / jnp.sqrt(jnp.float32(fan_in))
        # stored as [in, out] so the kernel does x @ W
        w = jax.random.uniform(kw, (fan_in, fan_out), jnp.float32, -bound, bound)
        b = jax.random.uniform(kb, (1, fan_out), jnp.float32, -bound, bound)
        return w, b

    k1, k2, k3 = jax.random.split(key, 3)
    w1, b1 = linear(k1, state_dim, 400)
    w2, b2 = linear(k2, 400, 300)
    w3, b3 = linear(k3, 300, action_dim)
    return (w1, b1, w2, b2, w3, b3)


def actor_reference(x, params, max_action):
    """Pure-JAX reference matching the PyTorch forward semantics."""
    w1, b1, w2, b2, w3, b3 = params
    h = jnp.maximum(x @ w1 + b1, 0.0)
    h = jnp.maximum(h @ w2 + b2, 0.0)
    return max_action * jnp.tanh(h @ w3 + b3)


if __name__ == "__main__":
    key = jax.random.PRNGKey(0)
    kp, kx1, kx2 = jax.random.split(key, 3)

    state_dim = 24      # e.g. BipedalWalker-style observation
    action_dim = 4
    max_action = 1.0

    params = init_actor_params(kp, state_dim, action_dim)

    # --- small demo batch (single grid step), f32 weights --------------------
    x_small = jax.random.normal(kx1, (2, state_dim), jnp.float32)
    out_small = jax.block_until_ready(actor_forward(x_small, params, max_action))
    ref_small = actor_reference(x_small, params, max_action)
    assert out_small.shape == (2, action_dim)
    assert jnp.allclose(out_small, ref_small, atol=1e-5, rtol=1e-5), (
        out_small, ref_small)

    # --- multi-tile grid (batch padding + slicing path), f32 weights ---------
    x_big = jax.random.normal(kx2, (20, state_dim), jnp.float32)
    out_big = jax.block_until_ready(
        actor_forward(x_big, params, max_action, block_batch=8))
    ref_big = actor_reference(x_big, params, max_action)
    assert out_big.shape == (20, action_dim)
    assert jnp.allclose(out_big, ref_big, atol=1e-5, rtol=1e-5)

    # --- jitted path (padding/slicing fused with the pallas_call) ------------
    out_jit = jax.block_until_ready(
        actor_forward_jit(x_big, params, max_action=max_action))
    assert out_jit.shape == (20, action_dim)
    assert jnp.allclose(out_jit, ref_big, atol=1e-5, rtol=1e-5)

    # --- bf16-weight path (halves the weight DMA on v6e/v7x) -----------------
    out_bf16 = jax.block_until_ready(
        actor_forward(x_big, params, max_action, block_batch=8,
                      weight_dtype=jnp.bfloat16))
    assert out_bf16.shape == (20, action_dim)
    assert jnp.allclose(out_bf16, ref_big, atol=3e-2, rtol=3e-2)

    print("KERNEL_OK")
</pallas_src>

<mosaic_0001>
module attributes {stable_mosaic.version = 11 : i64} {
  func.func @_actor_kernel(%arg0: i32, %arg1: memref<8x24xf32, #tpu.memory_space<vmem>>, %arg2: memref<24x512xf32, #tpu.memory_space<vmem>>, %arg3: memref<1x512xf32, #tpu.memory_space<vmem>>, %arg4: memref<512x384xf32, #tpu.memory_space<vmem>>, %arg5: memref<1x384xf32, #tpu.memory_space<vmem>>, %arg6: memref<384x128xf32, #tpu.memory_space<vmem>>, %arg7: memref<1x128xf32, #tpu.memory_space<vmem>>, %arg8: memref<8x128xf32, #tpu.memory_space<vmem>>) attributes {dimension_semantics = [#tpu.dimension_semantics<parallel>], iteration_bounds = array<i64: 1>, scalar_prefetch = 0 : i64, scratch_operands = 0 : i64, tpu.core_type = #tpu.core_type<tc>, window_params = [{transform_indices = @transform_0, window_bounds = array<i64: 8, 24>}, {pipeline_mode = #tpu.pipeline_mode<synchronous>, transform_indices = @transform_1, window_bounds = array<i64: 24, 512>}, {pipeline_mode = #tpu.pipeline_mode<synchronous>, transform_indices = @transform_2, window_bounds = array<i64: 1, 512>}, {pipeline_mode = #tpu.pipeline_mode<synchronous>, transform_indices = @transform_3, window_bounds = array<i64: 512, 384>}, {pipeline_mode = #tpu.pipeline_mode<synchronous>, transform_indices = @transform_4, window_bounds = array<i64: 1, 384>}, {pipeline_mode = #tpu.pipeline_mode<synchronous>, transform_indices = @transform_5, window_bounds = array<i64: 384, 128>}, {pipeline_mode = #tpu.pipeline_mode<synchronous>, transform_indices = @transform_6, window_bounds = array<i64: 1, 128>}, {transform_indices = @transform_7, window_bounds = array<i64: 8, 128>}]} {
    %c0 = arith.constant 0 : index
    %c0_0 = arith.constant 0 : index
    %0 = vector.load %arg1[%c0, %c0_0] : memref<8x24xf32, #tpu.memory_space<vmem>>, vector<8x24xf32>
    %c0_1 = arith.constant 0 : index
    %c0_2 = arith.constant 0 : index
    %1 = vector.load %arg2[%c0_1, %c0_2] : memref<24x512xf32, #tpu.memory_space<vmem>>, vector<24x512xf32>
    %cst = arith.constant dense<0.000000e+00> : vector<8x512xf32>
    %2 = tpu.matmul %0, %1, %cst {dimension_numbers = #tpu.dot_dimension_numbers<[1], [0], [0], [1], [0, 0, 1, 1], [], []>} : vector<8x24xf32>, vector<24x512xf32>, vector<8x512xf32> -> vector<8x512xf32>
    %c0_3 = arith.constant 0 : index
    %c0_4 = arith.constant 0 : index
    %3 = vector.load %arg3[%c0_3, %c0_4] : memref<1x512xf32, #tpu.memory_space<vmem>>, vector<1x512xf32>
    %4 = vector.broadcast %3 : vector<1x512xf32> to vector<8x512xf32>
    %5 = arith.addf %2, %4 : vector<8x512xf32>
    %cst_5 = arith.constant 0.000000e+00 : f32
    %6 = vector.broadcast %cst_5 : f32 to vector<8x512xf32>
    %7 = arith.maximumf %5, %6 : vector<8x512xf32>
    %c0_6 = arith.constant 0 : index
    %c0_7 = arith.constant 0 : index
    %8 = vector.load %arg4[%c0_6, %c0_7] : memref<512x384xf32, #tpu.memory_space<vmem>>, vector<512x384xf32>
    %cst_8 = arith.constant dense<0.000000e+00> : vector<8x384xf32>
    %9 = tpu.matmul %7, %8, %cst_8 {dimension_numbers = #tpu.dot_dimension_numbers<[1], [0], [0], [1], [0, 0, 1, 1], [], []>} : vector<8x512xf32>, vector<512x384xf32>, vector<8x384xf32> -> vector<8x384xf32>
    %c0_9 = arith.constant 0 : index
    %c0_10 = arith.constant 0 : index
    %10 = vector.load %arg5[%c0_9, %c0_10] : memref<1x384xf32, #tpu.memory_space<vmem>>, vector<1x384xf32>
    %11 = vector.broadcast %10 : vector<1x384xf32> to vector<8x384xf32>
    %12 = arith.addf %9, %11 : vector<8x384xf32>
    %cst_11 = arith.constant 0.000000e+00 : f32
    %13 = vector.broadcast %cst_11 : f32 to vector<8x384xf32>
    %14 = arith.maximumf %12, %13 : vector<8x384xf32>
    %c0_12 = arith.constant 0 : index
    %c0_13 = arith.constant 0 : index
    %15 = vector.load %arg6[%c0_12, %c0_13] : memref<384x128xf32, #tpu.memory_space<vmem>>, vector<384x128xf32>
    %cst_14 = arith.constant dense<0.000000e+00> : vector<8x128xf32>
    %16 = tpu.matmul %14, %15, %cst_14 {dimension_numbers = #tpu.dot_dimension_numbers<[1], [0], [0], [1], [0, 0, 1, 1], [], []>} : vector<8x384xf32>, vector<384x128xf32>, vector<8x128xf32> -> vector<8x128xf32>
    %c0_15 = arith.constant 0 : index
    %c0_16 = arith.constant 0 : index
    %17 = vector.load %arg7[%c0_15, %c0_16] : memref<1x128xf32, #tpu.memory_space<vmem>>, vector<1x128xf32>
    %18 = vector.broadcast %17 : vector<1x128xf32> to vector<8x128xf32>
    %19 = arith.addf %16, %18 : vector<8x128xf32>
    %20 = math.tanh %19 : vector<8x128xf32>
    %cst_17 = arith.constant 1.000000e+00 : f32
    %21 = vector.broadcast %cst_17 : f32 to vector<8x128xf32>
    %22 = arith.mulf %21, %20 : vector<8x128xf32>
    %c0_18 = arith.constant 0 : index
    %c0_19 = arith.constant 0 : index
    %23 = vector.load %arg8[%c0_18, %c0_19] : memref<8x128xf32, #tpu.memory_space<vmem>>, vector<8x128xf32>
    tpu.vector_store %arg8[%c0_18, %c0_19], %22 {strides = array<i32>} : memref<8x128xf32, #tpu.memory_space<vmem>>, vector<8x128xf32>,
    return
  }
  func.func @transform_0(%arg0: i32) -> (i32, i32) {
    %c0_i32 = arith.constant 0 : i32
    %c0_i32_0 = arith.constant 0 : i32
    return %arg0, %c0_i32 : i32, i32
  }
  func.func @transform_1(%arg0: i32) -> (i32, i32) {
    %c0_i32 = arith.constant 0 : i32
    %c0_i32_0 = arith.constant 0 : i32
    %c0_i32_1 = arith.constant 0 : i32
    return %c0_i32, %c0_i32_0 : i32, i32
  }
  func.func @transform_2(%arg0: i32) -> (i32, i32) {
    %c0_i32 = arith.constant 0 : i32
    %c0_i32_0 = arith.constant 0 : i32
    %c0_i32_1 = arith.constant 0 : i32
    return %c0_i32, %c0_i32_0 : i32, i32
  }
  func.func @transform_3(%arg0: i32) -> (i32, i32) {
    %c0_i32 = arith.constant 0 : i32
    %c0_i32_0 = arith.constant 0 : i32
    %c0_i32_1 = arith.constant 0 : i32
    return %c0_i32, %c0_i32_0 : i32, i32
  }
  func.func @transform_4(%arg0: i32) -> (i32, i32) {
    %c0_i32 = arith.constant 0 : i32
    %c0_i32_0 = arith.constant 0 : i32
    %c0_i32_1 = arith.constant 0 : i32
    return %c0_i32, %c0_i32_0 : i32, i32
  }
  func.func @transform_5(%arg0: i32) -> (i32, i32) {
    %c0_i32 = arith.constant 0 : i32
    %c0_i32_0 = arith.constant 0 : i32
    %c0_i32_1 = arith.constant 0 : i32
    return %c0_i32, %c0_i32_0 : i32, i32
  }
  func.func @transform_6(%arg0: i32) -> (i32, i32) {
    %c0_i32 = arith.constant 0 : i32
    %c0_i32_0 = arith.constant 0 : i32
    %c0_i32_1 = arith.constant 0 : i32
    return %c0_i32, %c0_i32_0 : i32, i32
  }
  func.func @transform_7(%arg0: i32) -> (i32, i32) {
    %c0_i32 = arith.constant 0 : i32
    %c0_i32_0 = arith.constant 0 : i32
    return %arg0, %c0_i32 : i32, i32
  }
}

</mosaic_0001>

<llo_original>
// kernel: tpu_custom_call.1
$region0: #{tpu_custom_call.1}
  #allocation0 [shape = 'u32[]', space=smem, size = 0x4, offset = 0x4, fixed_abs, tag = 'smem constant byte address 0x4 - core index']
  #allocation1 [shape = 'u32[144,128]{1,0:T(1,128)}', space=vmem, size = 0x12000, scoped, tag = 'internal scratch']
  %s0 = inlined_call_operand.hbm [shape: f32[8,24], index: 0, kind: input, shape index: {}]
  %s1 = inlined_call_operand.hbm [shape: f32[24,512], index: 1, kind: input, shape index: {}]
  %s2 = inlined_call_operand.vmem [shape: f32[1,512], index: 2, kind: input, shape index: {}]
  %s3 = inlined_call_operand.hbm [shape: f32[512,384], index: 3, kind: input, shape index: {}]
  %s4 = inlined_call_operand.vmem [shape: f32[1,384], index: 4, kind: input, shape index: {}]
  %s5 = inlined_call_operand.hbm [shape: f32[384,128], index: 5, kind: input, shape index: {}]
  %s6 = inlined_call_operand.vmem [shape: f32[1,128], index: 6, kind: input, shape index: {}]
  %s7 = inlined_call_operand.hbm [shape: f32[8,128], index: 7, kind: output, shape index: {}]
  %s8 = sld [smem:[#allocation0]]
  $region54: #{tpu_custom_call.1} parent=0
    _
  %s10 = ssub.s32 1, %s8
  %s11 = scalar_select 0, %s10, %s8
  $region1: #{tpu_custom_call.1} parent=0
    #allocation2 [shape = 'u8[4096]{0}', space=vmem, size = 0x1000, scoped, tag = 'input window, operand 0, single buffered']
    #allocation3 [shape = 's32[1]{0}', space=sflag, size = 0x4, scoped, tag = 'scoped memory for tpu_custom_call.1']
    #allocation4 [shape = 's32[1]{0}', space=sflag, size = 0x4, scoped, tag = 'scoped memory for tpu_custom_call.1']
    #allocation5 [shape = 'u8[49152]{0}', space=vmem, size = 0xc000, scoped, tag = 'input window, operand 1, single buffered']
    #allocation6 [shape = 's32[1]{0}', space=sflag, size = 0x4, scoped, tag = 'scoped memory for tpu_custom_call.1']
    #allocation7 [shape = 'u8[786432]{0}', space=vmem, size = 0xc0000, scoped, tag = 'input window, operand 3, single buffered']
    #allocation8 [shape = 'u8[196608]{0}', space=vmem, size = 0x30000, scoped, tag = 'input window, operand 5, single buffered']
    #allocation9 [shape = 's32[1]{0}', space=sflag, size = 0x4, scoped, tag = 'scoped memory for tpu_custom_call.1']
    #allocation10 [shape = 'u8[4096]{0}', space=vmem, size = 0x1000, scoped, tag = 'output window, operand 0, single buffered']
    %12 = vsyncpa [#allocation3], 0
    %13 = vsyncpa [#allocation6], 0
    %14 = vsyncpa [#allocation9], 0
    %15 = vsyncpa [#allocation4], 0
    // Predicated region
    $region2: #{tpu_custom_call.1} parent=1 // pred_check
      _
    $region3: #{tpu_custom_call.1} parent=1 // pred_check_branch
      %17 = sbr.rel (0) target = $region5
    $region4: #{tpu_custom_call.1} parent=1 // pred_region
      %s19 = ssub.s32 128, 128
      %20 = vsyncadd [#allocation3], %s19
      %s22 = sshll.u32 [#allocation2], 4
      %s23 = int_to_ptr.vmem [resolvable:$true] %s22
      %25 = dma.hbm_to_vmem [thread:$0]  %s0, 128, %s23, [#allocation3]
    $region5: #{tpu_custom_call.1} parent=1 // pred_fallthru
      _
    // Predicated region
    $region6: #{tpu_custom_call.1} parent=1 // pred_check
      _
    $region7: #{tpu_custom_call.1} parent=1 // pred_check_branch
      %27 = sbr.rel (0) target = $region9
    $region8: #{tpu_custom_call.1} parent=1 // pred_region
      %s29 = ssub.s32 1536, 1536
      %30 = vsyncadd [#allocation6], %s29
      %s31 = sshll.u32 [#allocation5], 4
      %s32 = int_to_ptr.vmem [resolvable:$true] %s31
      %37 = dma.hbm_to_vmem [thread:$0]  %s1, 1536, %s32, [#allocation6], 512, 512, 32
    $region9: #{tpu_custom_call.1} parent=1 // pred_fallthru
      _
    // Predicated region
    $region10: #{tpu_custom_call.1} parent=1 // pred_check
      _
    $region11: #{tpu_custom_call.1} parent=1 // pred_check_branch
      %39 = sbr.rel (0) target = $region13
    $region12: #{tpu_custom_call.1} parent=1 // pred_region
      _
    $region13: #{tpu_custom_call.1} parent=1 // pred_fallthru
      _
    // Predicated region
    $region14: #{tpu_custom_call.1} parent=1 // pred_check
      _
    $region15: #{tpu_custom_call.1} parent=1 // pred_check_branch
      %41 = sbr.rel (0) target = $region17
    $region16: #{tpu_custom_call.1} parent=1 // pred_region
      %s43 = ssub.s32 24576, 24576
      %44 = vsyncadd [#allocation6], %s43
      %s45 = sshll.u32 [#allocation7], 4
      %s46 = int_to_ptr.vmem [resolvable:$true] %s45
      %51 = dma.hbm_to_vmem [thread:$0]  %s3, 24576, %s46, [#allocation6], 384, 384, 24
    $region17: #{tpu_custom_call.1} parent=1 // pred_fallthru
      _
    // Predicated region
    $region18: #{tpu_custom_call.1} parent=1 // pred_check
      _
    $region19: #{tpu_custom_call.1} parent=1 // pred_check_branch
      %53 = sbr.rel (0) target = $region21
    $region20: #{tpu_custom_call.1} parent=1 // pred_region
      _
    $region21: #{tpu_custom_call.1} parent=1 // pred_fallthru
      _
    // Predicated region
    $region22: #{tpu_custom_call.1} parent=1 // pred_check
      _
    $region23: #{tpu_custom_call.1} parent=1 // pred_check_branch
      %55 = sbr.rel (0) target = $region25
    $region24: #{tpu_custom_call.1} parent=1 // pred_region
      %s57 = ssub.s32 6144, 6144
      %58 = vsyncadd [#allocation9], %s57
      %s59 = sshll.u32 [#allocation8], 4
      %s60 = int_to_ptr.vmem [resolvable:$true] %s59
      %65 = dma.hbm_to_vmem [thread:$0]  %s5, 6144, %s60, [#allocation9], 128, 128, 8
    $region25: #{tpu_custom_call.1} parent=1 // pred_fallthru
      _
    // Predicated region
    $region26: #{tpu_custom_call.1} parent=1 // pred_check
      _
    $region27: #{tpu_custom_call.1} parent=1 // pred_check_branch
      %67 = sbr.rel (0) target = $region29
    $region28: #{tpu_custom_call.1} parent=1 // pred_region
      _
    $region29: #{tpu_custom_call.1} parent=1 // pred_fallthru
      _
    // Predicated region
    $region30: #{tpu_custom_call.1} parent=1 // pred_check
      _
    $region31: #{tpu_custom_call.1} parent=1 // pred_check_branch
      %69 = sbr.rel (0) target = $region33
    $region32: #{tpu_custom_call.1} parent=1 // pred_region
      %70 = dma.done [#allocation3], 128
    $region33: #{tpu_custom_call.1} parent=1 // pred_fallthru
      _
    // Predicated region
    $region34: #{tpu_custom_call.1} parent=1 // pred_check
      _
    $region35: #{tpu_custom_call.1} parent=1 // pred_check_branch
      %72 = sbr.rel (0) target = $region37
    $region36: #{tpu_custom_call.1} parent=1 // pred_region
      %73 = dma.done [#allocation6], 1536
    $region37: #{tpu_custom_call.1} parent=1 // pred_fallthru
      _
    // Predicated region
    $region38: #{tpu_custom_call.1} parent=1 // pred_check
      _
    $region39: #{tpu_custom_call.1} parent=1 // pred_check_branch
      %75 = sbr.rel (0) target = $region41
    $region40: #{tpu_custom_call.1} parent=1 // pred_region
      %76 = dma.done [#allocation6], 24576
    $region41: #{tpu_custom_call.1} parent=1 // pred_fallthru
      _
    // Predicated region
    $region42: #{tpu_custom_call.1} parent=1 // pred_check
      _
    $region43: #{tpu_custom_call.1} parent=1 // pred_check_branch
      %78 = sbr.rel (0) target = $region45
    $region44: #{tpu_custom_call.1} parent=1 // pred_region
      %79 = dma.done [#allocation9], 6144
    $region45: #{tpu_custom_call.1} parent=1 // pred_fallthru
      _
    %v80 = vld [vmem:[#allocation2] sm:$0xff]
    %v81 = vld [vmem:[#allocation5] sm:$0xff]
    %v82 = vld [vmem:[#allocation5 + $0x8] sm:$0xff]
    %v83 = vld [vmem:[#allocation5 + $0x10] sm:$0xff]
    %v84 = vld [vmem:[#allocation5 + $0x18] sm:$0xff]
    %v85 = vld [vmem:[#allocation5 + $0x20] sm:$0xff]
    %v86 = vld [vmem:[#allocation5 + $0x28] sm:$0xff]
    %v87 = vld [vmem:[#allocation5 + $0x30] sm:$0xff]
    %v88 = vld [vmem:[#allocation5 + $0x38] sm:$0xff]
    %v89 = vld [vmem:[#allocation5 + $0x40] sm:$0xff]
    %v90 = vld [vmem:[#allocation5 + $0x48] sm:$0xff]
    %v91 = vld [vmem:[#allocation5 + $0x50] sm:$0xff]
    %v92 = vld [vmem:[#allocation5 + $0x58] sm:$0xff]
    %v93 = vld [vmem:[%s2] sm:$0xf]
    %v95 = vlaneseq
    %v96 = vshrl.u32 %v95, 7
    %v97 = vsub.s32 0, %v96
    %v98 = vrot.slane %v93, %v97
    %v99 = vlaneseq
    %v100 = vshrl.u32 %v99, 7
    %v101 = vsub.s32 1, %v100
    %v102 = vrot.slane %v93, %v101
    %v103 = vlaneseq
    %v104 = vshrl.u32 %v103, 7
    %v105 = vsub.s32 2, %v104
    %v106 = vrot.slane %v93, %v105
    %v107 = vlaneseq
    %v108 = vshrl.u32 %v107, 7
    %v109 = vsub.s32 3, %v108
    %v110 = vrot.slane %v93, %v109
    %vm115 = vcmask 195584
    %v117 = vsel %vm115, %v80, 0
    %119 = vmatprep.subr.mxu0 %v82
    %120 = vmatpush1.msra.mxu0 %v81
    %121 = vmatprep.subr.mxu0 %v86
    %122 = vmatpush1.msra.mxu0 %v85
    %123 = vmatprep.subr.mxu0 %v90
    %124 = vmatpush1.msra.mxu0 %v89
    %125 = vmatprep.subr.mxu0 0.0
    %126 = vmatpush1.msra.mxu0 0.0
    %127 = vmatprep.subr.mxu0 0.0
    %128 = vmatpush1.msra.mxu0 0.0
    %129 = vmatprep.subr.mxu0 0.0
    %130 = vmatpush1.msra.mxu0 0.0
    %131 = vmatprep.subr.mxu0 0.0
    %132 = vmatpush1.msra.mxu0 0.0
    %133 = vmatprep.subr.mxu0 0.0
    %134 = vmatpush1.msra.mxu0 0.0
    %135 = vmatprep.subr.mxu0 0.0
    %136 = vmatpush1.msra.mxu0 0.0
    %137 = vmatprep.subr.mxu0 0.0
    %138 = vmatpush1.msra.mxu0 0.0
    %139 = vmatprep.subr.mxu0 0.0
    %140 = vmatpush1.msra.mxu0 0.0
    %141 = vmatprep.subr.mxu0 0.0
    %142 = vmatpush1.msra.mxu0 0.0
    %143 = vmatprep.subr.mxu0 0.0
    %144 = vmatpush1.msra.mxu0 0.0
    %145 = vmatprep.subr.mxu0 0.0
    %146 = vmatpush1.msra.mxu0 0.0
    %147 = vmatprep.subr.mxu0 0.0
    %148 = vmatpush1.msra.mxu0 0.0
    %149 = vmatprep.subr.mxu0 0.0
    %150 = vmatpush1.msra.mxu0 0.0
    %151 = vmatprep.subr.mxu0 0.0
    %152 = vmatpush1.msra.mxu0 0.0
    %153 = vmatprep.subr.mxu0 0.0
    %154 = vmatpush1.msra.mxu0 0.0
    %155 = vmatprep.subr.mxu0 0.0
    %156 = vmatpush1.msra.mxu0 0.0
    %157 = vmatprep.subr.mxu0 0.0
    %158 = vmatpush1.msra.mxu0 0.0
    %159 = vmatprep.subr.mxu0 0.0
    %160 = vmatpush1.msra.mxu0 0.0
    %161 = vmatprep.subr.mxu0 0.0
    %162 = vmatpush1.msra.mxu0 0.0
    %163 = vmatprep.subr.mxu0 0.0
    %164 = vmatpush1.msra.mxu0 0.0
    %165 = vmatprep.subr.mxu0 0.0
    %166 = vmatpush1.msra.mxu0 0.0
    %167 = vmatprep.subr.mxu0 0.0
    %168 = vmatpush1.msra.mxu0 0.0
    %169 = vmatprep.subr.mxu0 0.0
    %170 = vmatpush1.msra.mxu0 0.0
    %171 = vmatprep.subr.mxu0 0.0
    %172 = vmatpush1.msra.mxu0 0.0
    %173 = vmatprep.subr.mxu0 0.0
    %174 = vmatpush1.msra.mxu0 0.0
    %175 = vmatprep.subr.mxu0 0.0
    %176 = vmatpush1.msra.mxu0 0.0
    %177 = vmatprep.subr.mxu0 0.0
    %178 = vmatpush1.msra.mxu0 0.0
    %179 = vmatprep.subr.mxu0 0.0
    %180 = vmatpush1.msra.mxu0 0.0
    %181 = vmatprep.subr.mxu0 0.0
    %182 = vmatpush1.msra.mxu0 0.0
    %183 = vmatprep.mubr.f32.mxu0 0.0
    %184 = vmatmul.mubr.f32.gmra.mrb[0].mxu0 %v117
    %v185 = vpop.f32.mrb[0].mxu0
    %v186 = vadd.f32 %v98, %v185
    %v187 = vpop.f32.mrb[0].mxu0
    %v188 = vadd.f32 %v102, %v187
    %189 = vdwg.mxu0
    %190 = vmatprep.subr.mxu0 %v84
    %191 = vmatpush1.msra.mxu0 %v83
    %192 = vmatprep.subr.mxu0 %v88
    %193 = vmatpush1.msra.mxu0 %v87
    %194 = vmatprep.subr.mxu0 %v92
    %195 = vmatpush1.msra.mxu0 %v91
    %196 = vmatprep.subr.mxu0 0.0
    %197 = vmatpush1.msra.mxu0 0.0
    %198 = vmatprep.subr.mxu0 0.0
    %199 = vmatpush1.msra.mxu0 0.0
    %200 = vmatprep.subr.mxu0 0.0
    %201 = vmatpush1.msra.mxu0 0.0
    %202 = vmatprep.subr.mxu0 0.0
    %203 = vmatpush1.msra.mxu0 0.0
    %204 = vmatprep.subr.mxu0 0.0
    %205 = vmatpush1.msra.mxu0 0.0
    %206 = vmatprep.subr.mxu0 0.0
    %207 = vmatpush1.msra.mxu0 0.0
    %208 = vmatprep.subr.mxu0 0.0
    %209 = vmatpush1.msra.mxu0 0.0
    %210 = vmatprep.subr.mxu0 0.0
    %211 = vmatpush1.msra.mxu0 0.0
    %212 = vmatprep.subr.mxu0 0.0
    %213 = vmatpush1.msra.mxu0 0.0
    %214 = vmatprep.subr.mxu0 0.0
    %215 = vmatpush1.msra.mxu0 0.0
    %216 = vmatprep.subr.mxu0 0.0
    %217 = vmatpush1.msra.mxu0 0.0
    %218 = vmatprep.subr.mxu0 0.0
    %219 = vmatpush1.msra.mxu0 0.0
    %220 = vmatprep.subr.mxu0 0.0
    %221 = vmatpush1.msra.mxu0 0.0
    %222 = vmatprep.subr.mxu0 0.0
    %223 = vmatpush1.msra.mxu0 0.0
    %224 = vmatprep.subr.mxu0 0.0
    %225 = vmatpush1.msra.mxu0 0.0
    %226 = vmatprep.subr.mxu0 0.0
    %227 = vmatpush1.msra.mxu0 0.0
    %228 = vmatprep.subr.mxu0 0.0
    %229 = vmatpush1.msra.mxu0 0.0
    %230 = vmatprep.subr.mxu0 0.0
    %231 = vmatpush1.msra.mxu0 0.0
    %232 = vmatprep.subr.mxu0 0.0
    %233 = vmatpush1.msra.mxu0 0.0
    %234 = vmatprep.subr.mxu0 0.0
    %235 = vmatpush1.msra.mxu0 0.0
    %236 = vmatprep.subr.mxu0 0.0
    %237 = vmatpush1.msra.mxu0 0.0
    %238 = vmatprep.subr.mxu0 0.0
    %239 = vmatpush1.msra.mxu0 0.0
    %240 = vmatprep.subr.mxu0 0.0
    %241 = vmatpush1.msra.mxu0 0.0
    %242 = vmatprep.subr.mxu0 0.0
    %243 = vmatpush1.msra.mxu0 0.0
    %244 = vmatprep.subr.mxu0 0.0
    %245 = vmatpush1.msra.mxu0 0.0
    %246 = vmatprep.subr.mxu0 0.0
    %247 = vmatpush1.msra.mxu0 0.0
    %248 = vmatprep.subr.mxu0 0.0
    %249 = vmatpush1.msra.mxu0 0.0
    %250 = vmatprep.subr.mxu0 0.0
    %251 = vmatpush1.msra.mxu0 0.0
    %252 = vmatprep.subr.mxu0 0.0
    %253 = vmatpush1.msra.mxu0 0.0
    %254 = vmatprep.mubr.f32.mxu0 0.0
    %255 = vmatmul.mubr.f32.gmra.mrb[0].mxu0 %v117
    %v256 = vpop.f32.mrb[0].mxu0
    %v257 = vadd.f32 %v106, %v256
    %v258 = vpop.f32.mrb[0].mxu0
    %v259 = vadd.f32 %v110, %v258
    %260 = vdwg.mxu0
    %v261 = vmax.f32 %v186, 0.0
    %v262 = vmax.f32 %v188, 0.0
    %v263 = vmax.f32 %v257, 0.0
    %v264 = vmax.f32 %v259, 0.0
    %v265 = vld [vmem:[#allocation7] sm:$0xff]
    %v266 = vld [vmem:[#allocation7 + $0x8] sm:$0xff]
    %v267 = vld [vmem:[#allocation7 + $0x10] sm:$0xff]
    %v268 = vld [vmem:[#allocation7 + $0x18] sm:$0xff]
    %v269 = vld [vmem:[#allocation7 + $0x20] sm:$0xff]
    %v270 = vld [vmem:[#allocation7 + $0x28] sm:$0xff]
    %v271 = vld [vmem:[#allocation7 + $0x30] sm:$0xff]
    %v272 = vld [vmem:[#allocation7 + $0x38] sm:$0xff]
    %v273 = vld [vmem:[#allocation7 + $0x40] sm:$0xff]
    %v274 = vld [vmem:[#allocation7 + $0x48] sm:$0xff]
    %v275 = vld [vmem:[#allocation7 + $0x50] sm:$0xff]
    %v276 = vld [vmem:[#allocation7 + $0x58] sm:$0xff]
    %v277 = vld [vmem:[#allocation7 + $0x60] sm:$0xff]
    %v278 = vld [vmem:[#allocation7 + $0x68] sm:$0xff]
    %v279 = vld [vmem:[#allocation7 + $0x70] sm:$0xff]
    %v280 = vld [vmem:[#allocation7 + $0x78] sm:$0xff]
    %v281 = vld [vmem:[#allocation7 + $0x80] sm:$0xff]
    %v282 = vld [vmem:[#allocation7 + $0x88] sm:$0xff]
    %v283 = vld [vmem:[#allocation7 + $0x90] sm:$0xff]
    %v284 = vld [vmem:[#allocation7 + $0x98] sm:$0xff]
    %v285 = vld [vmem:[#allocation7 + $0xa0] sm:$0xff]
    %v286 = vld [vmem:[#allocation7 + $0xa8] sm:$0xff]
    %v287 = vld [vmem:[#allocation7 + $0xb0] sm:$0xff]
    %v288 = vld [vmem:[#allocation7 + $0xb8] sm:$0xff]
    %v289 = vld [vmem:[#allocation7 + $0xc0] sm:$0xff]
    %v290 = vld [vmem:[#allocation7 + $0xc8] sm:$0xff]
    %v291 = vld [vmem:[#allocation7 + $0xd0] sm:$0xff]
    %v292 = vld [vmem:[#allocation7 + $0xd8] sm:$0xff]
    %v293 = vld [vmem:[#allocation7 + $0xe0] sm:$0xff]
    %v294 = vld [vmem:[#allocation7 + $0xe8] sm:$0xff]
    %v295 = vld [vmem:[#allocation7 + $0xf0] sm:$0xff]
    %v296 = vld [vmem:[#allocation7 + $0xf8] sm:$0xff]
    %v297 = vld [vmem:[#allocation7 + $0x100] sm:$0xff]
    %v298 = vld [vmem:[#allocation7 + $0x108] sm:$0xff]
    %v299 = vld [vmem:[#allocation7 + $0x110] sm:$0xff]
    %v300 = vld [vmem:[#allocation7 + $0x118] sm:$0xff]
    %v301 = vld [vmem:[#allocation7 + $0x120] sm:$0xff]
    %v302 = vld [vmem:[#allocation7 + $0x128] sm:$0xff]
    %v303 = vld [vmem:[#allocation7 + $0x130] sm:$0xff]
    %v304 = vld [vmem:[#allocation7 + $0x138] sm:$0xff]
    %v305 = vld [vmem:[#allocation7 + $0x140] sm:$0xff]
    %v306 = vld [vmem:[#allocation7 + $0x148] sm:$0xff]
    %v307 = vld [vmem:[#allocation7 + $0x150] sm:$0xff]
    %v308 = vld [vmem:[#allocation7 + $0x158] sm:$0xff]
    %v309 = vld [vmem:[#allocation7 + $0x160] sm:$0xff]
    %v310 = vld [vmem:[#allocation7 + $0x168] sm:$0xff]
    %v311 = vld [vmem:[#allocation7 + $0x170] sm:$0xff]
    %v312 = vld [vmem:[#allocation7 + $0x178] sm:$0xff]
    %v313 = vld [vmem:[#allocation7 + $0x180] sm:$0xff]
    %v314 = vld [vmem:[#allocation7 + $0x188] sm:$0xff]
    %v315 = vld [vmem:[#allocation7 + $0x190] sm:$0xff]
    %v316 = vld [vmem:[#allocation7 + $0x198] sm:$0xff]
    %v317 = vld [vmem:[#allocation7 + $0x1a0] sm:$0xff]
    %v318 = vld [vmem:[#allocation7 + $0x1a8] sm:$0xff]
    %v319 = vld [vmem:[#allocation7 + $0x1b0] sm:$0xff]
    %v320 = vld [vmem:[#allocation7 + $0x1b8] sm:$0xff]
    %v321 = vld [vmem:[#allocation7 + $0x1c0] sm:$0xff]
    %v322 = vld [vmem:[#allocation7 + $0x1c8] sm:$0xff]
    %v323 = vld [vmem:[#allocation7 + $0x1d0] sm:$0xff]
    %v324 = vld [vmem:[#allocation7 + $0x1d8] sm:$0xff]
    %v325 = vld [vmem:[#allocation7 + $0x1e0] sm:$0xff]
    %v326 = vld [vmem:[#allocation7 + $0x1e8] sm:$0xff]
    %v327 = vld [vmem:[#allocation7 + $0x1f0] sm:$0xff]
    %v328 = vld [vmem:[#allocation7 + $0x1f8] sm:$0xff]
    %v329 = vld [vmem:[#allocation7 + $0x200] sm:$0xff]
    %v330 = vld [vmem:[#allocation7 + $0x208] sm:$0xff]
    %v331 = vld [vmem:[#allocation7 + $0x210] sm:$0xff]
    %v332 = vld [vmem:[#allocation7 + $0x218] sm:$0xff]
    %v333 = vld [vmem:[#allocation7 + $0x220] sm:$0xff]
    %v334 = vld [vmem:[#allocation7 + $0x228] sm:$0xff]
    %v335 = vld [vmem:[#allocation7 + $0x230] sm:$0xff]
    %v336 = vld [vmem:[#allocation7 + $0x238] sm:$0xff]
    %v337 = vld [vmem:[#allocation7 + $0x240] sm:$0xff]
    %v338 = vld [vmem:[#allocation7 + $0x248] sm:$0xff]
    %v339 = vld [vmem:[#allocation7 + $0x250] sm:$0xff]
    %v340 = vld [vmem:[#allocation7 + $0x258] sm:$0xff]
    %v341 = vld [vmem:[#allocation7 + $0x260] sm:$0xff]
    %v342 = vld [vmem:[#allocation7 + $0x268] sm:$0xff]
    %v343 = vld [vmem:[#allocation7 + $0x270] sm:$0xff]
    %v344 = vld [vmem:[#allocation7 + $0x278] sm:$0xff]
    %v345 = vld [vmem:[#allocation7 + $0x280] sm:$0xff]
    %v346 = vld [vmem:[#allocation7 + $0x288] sm:$0xff]
    %v347 = vld [vmem:[#allocation7 + $0x290] sm:$0xff]
    %v348 = vld [vmem:[#allocation7 + $0x298] sm:$0xff]
    %v349 = vld [vmem:[#allocation7 + $0x2a0] sm:$0xff]
    %v350 = vld [vmem:[#allocation7 + $0x2a8] sm:$0xff]
    %v351 = vld [vmem:[#allocation7 + $0x2b0] sm:$0xff]
    %v352 = vld [vmem:[#allocation7 + $0x2b8] sm:$0xff]
    %v353 = vld [vmem:[#allocation7 + $0x2c0] sm:$0xff]
    %v354 = vld [vmem:[#allocation7 + $0x2c8] sm:$0xff]
    %v355 = vld [vmem:[#allocation7 + $0x2d0] sm:$0xff]
    %v356 = vld [vmem:[#allocation7 + $0x2d8] sm:$0xff]
    %v357 = vld [vmem:[#allocation7 + $0x2e0] sm:$0xff]
    %v358 = vld [vmem:[#allocation7 + $0x2e8] sm:$0xff]
    %v359 = vld [vmem:[#allocation7 + $0x2f0] sm:$0xff]
    %v360 = vld [vmem:[#allocation7 + $0x2f8] sm:$0xff]
    %v361 = vld [vmem:[#allocation7 + $0x300] sm:$0xff]
    %v362 = vld [vmem:[#allocation7 + $0x308] sm:$0xff]
    %v363 = vld [vmem:[#allocation7 + $0x310] sm:$0xff]
    %v364 = vld [vmem:[#allocation7 + $0x318] sm:$0xff]
    %v365 = vld [vmem:[#allocation7 + $0x320] sm:$0xff]
    %v366 = vld [vmem:[#allocation7 + $0x328] sm:$0xff]
    %v367 = vld [vmem:[#allocation7 + $0x330] sm:$0xff]
    %v368 = vld [vmem:[#allocation7 + $0x338] sm:$0xff]
    %v369 = vld [vmem:[#allocation7 + $0x340] sm:$0xff]
    %v370 = vld [vmem:[#allocation7 + $0x348] sm:$0xff]
    %v371 = vld [vmem:[#allocation7 + $0x350] sm:$0xff]
    %v372 = vld [vmem:[#allocation7 + $0x358] sm:$0xff]
    %v373 = vld [vmem:[#allocation7 + $0x360] sm:$0xff]
    %v374 = vld [vmem:[#allocation7 + $0x368] sm:$0xff]
    %v375 = vld [vmem:[#allocation7 + $0x370] sm:$0xff]
    %v376 = vld [vmem:[#allocation7 + $0x378] sm:$0xff]
    %v377 = vld [vmem:[#allocation7 + $0x380] sm:$0xff]
    %v378 = vld [vmem:[#allocation7 + $0x388] sm:$0xff]
    %v379 = vld [vmem:[#allocation7 + $0x390] sm:$0xff]
    %v380 = vld [vmem:[#allocation7 + $0x398] sm:$0xff]
    %v381 = vld [vmem:[#allocation7 + $0x3a0] sm:$0xff]
    %v382 = vld [vmem:[#allocation7 + $0x3a8] sm:$0xff]
    %v383 = vld [vmem:[#allocation7 + $0x3b0] sm:$0xff]
    %v384 = vld [vmem:[#allocation7 + $0x3b8] sm:$0xff]
    %v385 = vld [vmem:[#allocation7 + $0x3c0] sm:$0xff]
    %v386 = vld [vmem:[#allocation7 + $0x3c8] sm:$0xff]
    %v387 = vld [vmem:[#allocation7 + $0x3d0] sm:$0xff]
    %v388 = vld [vmem:[#allocation7 + $0x3d8] sm:$0xff]
    %v389 = vld [vmem:[#allocation7 + $0x3e0] sm:$0xff]
    %v390 = vld [vmem:[#allocation7 + $0x3e8] sm:$0xff]
    %v391 = vld [vmem:[#allocation7 + $0x3f0] sm:$0xff]
    %v392 = vld [vmem:[#allocation7 + $0x3f8] sm:$0xff]
    %v393 = vld [vmem:[#allocation7 + $0x400] sm:$0xff]
    %v394 = vld [vmem:[#allocation7 + $0x408] sm:$0xff]
    %v395 = vld [vmem:[#allocation7 + $0x410] sm:$0xff]
    %v396 = vld [vmem:[#allocation7 + $0x418] sm:$0xff]
    %v397 = vld [vmem:[#allocation7 + $0x420] sm:$0xff]
    %v398 = vld [vmem:[#allocation7 + $0x428] sm:$0xff]
    %v399 = vld [vmem:[#allocation7 + $0x430] sm:$0xff]
    %v400 = vld [vmem:[#allocation7 + $0x438] sm:$0xff]
    %v401 = vld [vmem:[#allocation7 + $0x440] sm:$0xff]
    %v402 = vld [vmem:[#allocation7 + $0x448] sm:$0xff]
    %v403 = vld [vmem:[#allocation7 + $0x450] sm:$0xff]
    %v404 = vld [vmem:[#allocation7 + $0x458] sm:$0xff]
    %v405 = vld [vmem:[#allocation7 + $0x460] sm:$0xff]
    %v406 = vld [vmem:[#allocation7 + $0x468] sm:$0xff]
    %v407 = vld [vmem:[#allocation7 + $0x470] sm:$0xff]
    %v408 = vld [vmem:[#allocation7 + $0x478] sm:$0xff]
    %v409 = vld [vmem:[#allocation7 + $0x480] sm:$0xff]
    %v410 = vld [vmem:[#allocation7 + $0x488] sm:$0xff]
    %v411 = vld [vmem:[#allocation7 + $0x490] sm:$0xff]
    %v412 = vld [vmem:[#allocation7 + $0x498] sm:$0xff]
    %v413 = vld [vmem:[#allocation7 + $0x4a0] sm:$0xff]
    %v414 = vld [vmem:[#allocation7 + $0x4a8] sm:$0xff]
    %v415 = vld [vmem:[#allocation7 + $0x4b0] sm:$0xff]
    %v416 = vld [vmem:[#allocation7 + $0x4b8] sm:$0xff]
    %v417 = vld [vmem:[#allocation7 + $0x4c0] sm:$0xff]
    %v418 = vld [vmem:[#allocation7 + $0x4c8] sm:$0xff]
    %v419 = vld [vmem:[#allocation7 + $0x4d0] sm:$0xff]
    %v420 = vld [vmem:[#allocation7 + $0x4d8] sm:$0xff]
    %v421 = vld [vmem:[#allocation7 + $0x4e0] sm:$0xff]
    %v422 = vld [vmem:[#allocation7 + $0x4e8] sm:$0xff]
    %v423 = vld [vmem:[#allocation7 + $0x4f0] sm:$0xff]
    %v424 = vld [vmem:[#allocation7 + $0x4f8] sm:$0xff]
    %v425 = vld [vmem:[#allocation7 + $0x500] sm:$0xff]
    %v426 = vld [vmem:[#allocation7 + $0x508] sm:$0xff]
    %v427 = vld [vmem:[#allocation7 + $0x510] sm:$0xff]
    %v428 = vld [vmem:[#allocation7 + $0x518] sm:$0xff]
    %v429 = vld [vmem:[#allocation7 + $0x520] sm:$0xff]
    %v430 = vld [vmem:[#allocation7 + $0x528] sm:$0xff]
    %v431 = vld [vmem:[#allocation7 + $0x530] sm:$0xff]
    %v432 = vld [vmem:[#allocation7 + $0x538] sm:$0xff]
    %v433 = vld [vmem:[#allocation7 + $0x540] sm:$0xff]
    %v434 = vld [vmem:[#allocation7 + $0x548] sm:$0xff]
    %v435 = vld [vmem:[#allocation7 + $0x550] sm:$0xff]
    %v436 = vld [vmem:[#allocation7 + $0x558] sm:$0xff]
    %v437 = vld [vmem:[#allocation7 + $0x560] sm:$0xff]
    %v438 = vld [vmem:[#allocation7 + $0x568] sm:$0xff]
    %v439 = vld [vmem:[#allocation7 + $0x570] sm:$0xff]
    %v440 = vld [vmem:[#allocation7 + $0x578] sm:$0xff]
    %v441 = vld [vmem:[#allocation7 + $0x580] sm:$0xff]
    %v442 = vld [vmem:[#allocation7 + $0x588] sm:$0xff]
    %v443 = vld [vmem:[#allocation7 + $0x590] sm:$0xff]
    %v444 = vld [vmem:[#allocation7 + $0x598] sm:$0xff]
    %v445 = vld [vmem:[#allocation7 + $0x5a0] sm:$0xff]
    %v446 = vld [vmem:[#allocation7 + $0x5a8] sm:$0xff]
    %v447 = vld [vmem:[#allocation7 + $0x5b0] sm:$0xff]
    %v448 = vld [vmem:[#allocation7 + $0x5b8] sm:$0xff]
    %v449 = vld [vmem:[#allocation7 + $0x5c0] sm:$0xff]
    %v450 = vld [vmem:[#allocation7 + $0x5c8] sm:$0xff]
    %v451 = vld [vmem:[#allocation7 + $0x5d0] sm:$0xff]
    %v452 = vld [vmem:[#allocation7 + $0x5d8] sm:$0xff]
    %v453 = vld [vmem:[#allocation7 + $0x5e0] sm:$0xff]
    %v454 = vld [vmem:[#allocation7 + $0x5e8] sm:$0xff]
    %v455 = vld [vmem:[#allocation7 + $0x5f0] sm:$0xff]
    %v456 = vld [vmem:[#allocation7 + $0x5f8] sm:$0xff]
    %v457 = vld [vmem:[%s4] sm:$0x7]
    %v459 = vlaneseq
    %v460 = vshrl.u32 %v459, 7
    %v461 = vsub.s32 0, %v460
    %v462 = vrot.slane %v457, %v461
    %v463 = vlaneseq
    %v464 = vshrl.u32 %v463, 7
    %v465 = vsub.s32 1, %v464
    %v466 = vrot.slane %v457, %v465
    %v467 = vlaneseq
    %v468 = vshrl.u32 %v467, 7
    %v469 = vsub.s32 2, %v468
    %v470 = vrot.slane %v457, %v469
    %474 = vmatprep.subr.mxu0 %v266
    %475 = vmatpush1.msra.mxu0 %v265
    %476 = vmatprep.subr.mxu0 %v269
    %477 = vmatpush1.msra.mxu0 %v268
    %478 = vmatprep.subr.mxu0 %v272
    %479 = vmatpush1.msra.mxu0 %v271
    %480 = vmatprep.subr.mxu0 %v275
    %481 = vmatpush1.msra.mxu0 %v274
    %482 = vmatprep.subr.mxu0 %v278
    %483 = vmatpush1.msra.mxu0 %v277
    %484 = vmatprep.subr.mxu0 %v281
    %485 = vmatpush1.msra.mxu0 %v280
    %486 = vmatprep.subr.mxu0 %v284
    %487 = vmatpush1.msra.mxu0 %v283
    %488 = vmatprep.subr.mxu0 %v287
    %489 = vmatpush1.msra.mxu0 %v286
    %490 = vmatprep.subr.mxu0 %v290
    %491 = vmatpush1.msra.mxu0 %v289
    %492 = vmatprep.subr.mxu0 %v293
    %493 = vmatpush1.msra.mxu0 %v292
    %494 = vmatprep.subr.mxu0 %v296
    %495 = vmatpush1.msra.mxu0 %v295
    %496 = vmatprep.subr.mxu0 %v299
    %497 = vmatpush1.msra.mxu0 %v298
    %498 = vmatprep.subr.mxu0 %v302
    %499 = vmatpush1.msra.mxu0 %v301
    %500 = vmatprep.subr.mxu0 %v305
    %501 = vmatpush1.msra.mxu0 %v304
    %502 = vmatprep.subr.mxu0 %v308
    %503 = vmatpush1.msra.mxu0 %v307
    %504 = vmatprep.subr.mxu0 %v311
    %505 = vmatpush1.msra.mxu0 %v310
    %506 = vmatprep.subr.mxu0 %v314
    %507 = vmatpush1.msra.mxu0 %v313
    %508 = vmatprep.subr.mxu0 %v317
    %509 = vmatpush1.msra.mxu0 %v316
    %510 = vmatprep.subr.mxu0 %v320
    %511 = vmatpush1.msra.mxu0 %v319
    %512 = vmatprep.subr.mxu0 %v323
    %513 = vmatpush1.msra.mxu0 %v322
    %514 = vmatprep.subr.mxu0 %v326
    %515 = vmatpush1.msra.mxu0 %v325
    %516 = vmatprep.subr.mxu0 %v329
    %517 = vmatpush1.msra.mxu0 %v328
    %518 = vmatprep.subr.mxu0 %v332
    %519 = vmatpush1.msra.mxu0 %v331
    %520 = vmatprep.subr.mxu0 %v335
    %521 = vmatpush1.msra.mxu0 %v334
    %522 = vmatprep.subr.mxu0 %v338
    %523 = vmatpush1.msra.mxu0 %v337
    %524 = vmatprep.subr.mxu0 %v341
    %525 = vmatpush1.msra.mxu0 %v340
    %526 = vmatprep.subr.mxu0 %v344
    %527 = vmatpush1.msra.mxu0 %v343
    %528 = vmatprep.subr.mxu0 %v347
    %529 = vmatpush1.msra.mxu0 %v346
    %530 = vmatprep.subr.mxu0 %v350
    %531 = vmatpush1.msra.mxu0 %v349
    %532 = vmatprep.subr.mxu0 %v353
    %533 = vmatpush1.msra.mxu0 %v352
    %534 = vmatprep.subr.mxu0 %v356
    %535 = vmatpush1.msra.mxu0 %v355
    %536 = vmatprep.subr.mxu0 %v359
    %537 = vmatpush1.msra.mxu0 %v358
    %538 = vmatprep.mubr.f32.mxu0 %v262
    %539 = vmatmul.mubr.f32.gmra.mrb[0].mxu0 %v261
    %v540 = vpop.f32.mrb[0].mxu0
    %v541 = vadd.f32 %v462, %v540
    %v542 = vpop.f32.mrb[0].mxu0
    %v543 = vadd.f32 %v466, %v542
    %544 = vdwg.mxu0
    %545 = vmatprep.subr.mxu0 %v362
    %546 = vmatpush1.msra.mxu0 %v361
    %547 = vmatprep.subr.mxu0 %v365
    %548 = vmatpush1.msra.mxu0 %v364
    %549 = vmatprep.subr.mxu0 %v368
    %550 = vmatpush1.msra.mxu0 %v367
    %551 = vmatprep.subr.mxu0 %v371
    %552 = vmatpush1.msra.mxu0 %v370
    %553 = vmatprep.subr.mxu0 %v374
    %554 = vmatpush1.msra.mxu0 %v373
    %555 = vmatprep.subr.mxu0 %v377
    %556 = vmatpush1.msra.mxu0 %v376
    %557 = vmatprep.subr.mxu0 %v380
    %558 = vmatpush1.msra.mxu0 %v379
    %559 = vmatprep.subr.mxu0 %v383
    %560 = vmatpush1.msra.mxu0 %v382
    %561 = vmatprep.subr.mxu0 %v386
    %562 = vmatpush1.msra.mxu0 %v385
    %563 = vmatprep.subr.mxu0 %v389
    %564 = vmatpush1.msra.mxu0 %v388
    %565 = vmatprep.subr.mxu0 %v392
    %566 = vmatpush1.msra.mxu0 %v391
    %567 = vmatprep.subr.mxu0 %v395
    %568 = vmatpush1.msra.mxu0 %v394
    %569 = vmatprep.subr.mxu0 %v398
    %570 = vmatpush1.msra.mxu0 %v397
    %571 = vmatprep.subr.mxu0 %v401
    %572 = vmatpush1.msra.mxu0 %v400
    %573 = vmatprep.subr.mxu0 %v404
    %574 = vmatpush1.msra.mxu0 %v403
    %575 = vmatprep.subr.mxu0 %v407
    %576 = vmatpush1.msra.mxu0 %v406
    %577 = vmatprep.subr.mxu0 %v410
    %578 = vmatpush1.msra.mxu0 %v409
    %579 = vmatprep.subr.mxu0 %v413
    %580 = vmatpush1.msra.mxu0 %v412
    %581 = vmatprep.subr.mxu0 %v416
    %582 = vmatpush1.msra.mxu0 %v415
    %583 = vmatprep.subr.mxu0 %v419
    %584 = vmatpush1.msra.mxu0 %v418
    %585 = vmatprep.subr.mxu0 %v422
    %586 = vmatpush1.msra.mxu0 %v421
    %587 = vmatprep.subr.mxu0 %v425
    %588 = vmatpush1.msra.mxu0 %v424
    %589 = vmatprep.subr.mxu0 %v428
    %590 = vmatpush1.msra.mxu0 %v427
    %591 = vmatprep.subr.mxu0 %v431
    %592 = vmatpush1.msra.mxu0 %v430
    %593 = vmatprep.subr.mxu0 %v434
    %594 = vmatpush1.msra.mxu0 %v433
    %595 = vmatprep.subr.mxu0 %v437
    %596 = vmatpush1.msra.mxu0 %v436
    %597 = vmatprep.subr.mxu0 %v440
    %598 = vmatpush1.msra.mxu0 %v439
    %599 = vmatprep.subr.mxu0 %v443
    %600 = vmatpush1.msra.mxu0 %v442
    %601 = vmatprep.subr.mxu0 %v446
    %602 = vmatpush1.msra.mxu0 %v445
    %603 = vmatprep.subr.mxu0 %v449
    %604 = vmatpush1.msra.mxu0 %v448
    %605 = vmatprep.subr.mxu0 %v452
    %606 = vmatpush1.msra.mxu0 %v451
    %607 = vmatprep.subr.mxu0 %v455
    %608 = vmatpush1.msra.mxu0 %v454
    %609 = vmatprep.mubr.f32.mxu0 %v264
    %610 = vmatmul.mubr.f32.gmra.mrb[0].mxu0 %v263
    %v611 = vpop.f32.mrb[0].mxu0
    %v612 = vadd.f32 %v541, %v611
    %v613 = vpop.f32.mrb[0].mxu0
    %v614 = vadd.f32 %v543, %v613
    %615 = vdwg.mxu0
    %616 = vmatprep.subr.mxu0 0.0
    %617 = vmatpush1.msra.mxu0 %v267
    %618 = vmatprep.subr.mxu0 0.0
    %619 = vmatpush1.msra.mxu0 %v270
    %620 = vmatprep.subr.mxu0 0.0
    %621 = vmatpush1.msra.mxu0 %v273
    %622 = vmatprep.subr.mxu0 0.0
    %623 = vmatpush1.msra.mxu0 %v276
    %624 = vmatprep.subr.mxu0 0.0
    %625 = vmatpush1.msra.mxu0 %v279
    %626 = vmatprep.subr.mxu0 0.0
    %627 = vmatpush1.msra.mxu0 %v282
    %628 = vmatprep.subr.mxu0 0.0
    %629 = vmatpush1.msra.mxu0 %v285
    %630 = vmatprep.subr.mxu0 0.0
    %631 = vmatpush1.msra.mxu0 %v288
    %632 = vmatprep.subr.mxu0 0.0
    %633 = vmatpush1.msra.mxu0 %v291
    %634 = vmatprep.subr.mxu0 0.0
    %635 = vmatpush1.msra.mxu0 %v294
    %636 = vmatprep.subr.mxu0 0.0
    %637 = vmatpush1.msra.mxu0 %v297
    %638 = vmatprep.subr.mxu0 0.0
    %639 = vmatpush1.msra.mxu0 %v300
    %640 = vmatprep.subr.mxu0 0.0
    %641 = vmatpush1.msra.mxu0 %v303
    %642 = vmatprep.subr.mxu0 0.0
    %643 = vmatpush1.msra.mxu0 %v306
    %644 = vmatprep.subr.mxu0 0.0
    %645 = vmatpush1.msra.mxu0 %v309
    %646 = vmatprep.subr.mxu0 0.0
    %647 = vmatpush1.msra.mxu0 %v312
    %648 = vmatprep.subr.mxu0 0.0
    %649 = vmatpush1.msra.mxu0 %v315
    %650 = vmatprep.subr.mxu0 0.0
    %651 = vmatpush1.msra.mxu0 %v318
    %652 = vmatprep.subr.mxu0 0.0
    %653 = vmatpush1.msra.mxu0 %v321
    %654 = vmatprep.subr.mxu0 0.0
    %655 = vmatpush1.msra.mxu0 %v324
    %656 = vmatprep.subr.mxu0 0.0
    %657 = vmatpush1.msra.mxu0 %v327
    %658 = vmatprep.subr.mxu0 0.0
    %659 = vmatpush1.msra.mxu0 %v330
    %660 = vmatprep.subr.mxu0 0.0
    %661 = vmatpush1.msra.mxu0 %v333
    %662 = vmatprep.subr.mxu0 0.0
    %663 = vmatpush1.msra.mxu0 %v336
    %664 = vmatprep.subr.mxu0 0.0
    %665 = vmatpush1.msra.mxu0 %v339
    %666 = vmatprep.subr.mxu0 0.0
    %667 = vmatpush1.msra.mxu0 %v342
    %668 = vmatprep.subr.mxu0 0.0
    %669 = vmatpush1.msra.mxu0 %v345
    %670 = vmatprep.subr.mxu0 0.0
    %671 = vmatpush1.msra.mxu0 %v348
    %672 = vmatprep.subr.mxu0 0.0
    %673 = vmatpush1.msra.mxu0 %v351
    %674 = vmatprep.subr.mxu0 0.0
    %675 = vmatpush1.msra.mxu0 %v354
    %676 = vmatprep.subr.mxu0 0.0
    %677 = vmatpush1.msra.mxu0 %v357
    %678 = vmatprep.subr.mxu0 0.0
    %679 = vmatpush1.msra.mxu0 %v360
    %680 = vmatprep.mubr.f32.mxu0 %v262
    %681 = vmatmul.mubr.f32.gmra.mrb[0].mxu0 %v261
    %v682 = vpop.f32.mrb[0].mxu0
    %v683 = vadd.f32 %v470, %v682
    %v684 = vpop.f32.mrb[0].mxu0
    %685 = vdwg.mxu0
    %686 = vmatprep.subr.mxu0 0.0
    %687 = vmatpush1.msra.mxu0 %v363
    %688 = vmatprep.subr.mxu0 0.0
    %689 = vmatpush1.msra.mxu0 %v366
    %690 = vmatprep.subr.mxu0 0.0
    %691 = vmatpush1.msra.mxu0 %v369
    %692 = vmatprep.subr.mxu0 0.0
    %693 = vmatpush1.msra.mxu0 %v372
    %694 = vmatprep.subr.mxu0 0.0
    %695 = vmatpush1.msra.mxu0 %v375
    %696 = vmatprep.subr.mxu0 0.0
    %697 = vmatpush1.msra.mxu0 %v378
    %698 = vmatprep.subr.mxu0 0.0
    %699 = vmatpush1.msra.mxu0 %v381
    %700 = vmatprep.subr.mxu0 0.0
    %701 = vmatpush1.msra.mxu0 %v384
    %702 = vmatprep.subr.mxu0 0.0
    %703 = vmatpush1.msra.mxu0 %v387
    %704 = vmatprep.subr.mxu0 0.0
    %705 = vmatpush1.msra.mxu0 %v390
    %706 = vmatprep.subr.mxu0 0.0
    %707 = vmatpush1.msra.mxu0 %v393
    %708 = vmatprep.subr.mxu0 0.0
    %709 = vmatpush1.msra.mxu0 %v396
    %710 = vmatprep.subr.mxu0 0.0
    %711 = vmatpush1.msra.mxu0 %v399
    %712 = vmatprep.subr.mxu0 0.0
    %713 = vmatpush1.msra.mxu0 %v402
    %714 = vmatprep.subr.mxu0 0.0
    %715 = vmatpush1.msra.mxu0 %v405
    %716 = vmatprep.subr.mxu0 0.0
    %717 = vmatpush1.msra.mxu0 %v408
    %718 = vmatprep.subr.mxu0 0.0
    %719 = vmatpush1.msra.mxu0 %v411
    %720 = vmatprep.subr.mxu0 0.0
    %721 = vmatpush1.msra.mxu0 %v414
    %722 = vmatprep.subr.mxu0 0.0
    %723 = vmatpush1.msra.mxu0 %v417
    %724 = vmatprep.subr.mxu0 0.0
    %725 = vmatpush1.msra.mxu0 %v420
    %726 = vmatprep.subr.mxu0 0.0
    %727 = vmatpush1.msra.mxu0 %v423
    %728 = vmatprep.subr.mxu0 0.0
    %729 = vmatpush1.msra.mxu0 %v426
    %730 = vmatprep.subr.mxu0 0.0
    %731 = vmatpush1.msra.mxu0 %v429
    %732 = vmatprep.subr.mxu0 0.0
    %733 = vmatpush1.msra.mxu0 %v432
    %734 = vmatprep.subr.mxu0 0.0
    %735 = vmatpush1.msra.mxu0 %v435
    %736 = vmatprep.subr.mxu0 0.0
    %737 = vmatpush1.msra.mxu0 %v438
    %738 = vmatprep.subr.mxu0 0.0
    %739 = vmatpush1.msra.mxu0 %v441
    %740 = vmatprep.subr.mxu0 0.0
    %741 = vmatpush1.msra.mxu0 %v444
    %742 = vmatprep.subr.mxu0 0.0
    %743 = vmatpush1.msra.mxu0 %v447
    %744 = vmatprep.subr.mxu0 0.0
    %745 = vmatpush1.msra.mxu0 %v450
    %746 = vmatprep.subr.mxu0 0.0
    %747 = vmatpush1.msra.mxu0 %v453
    %748 = vmatprep.subr.mxu0 0.0
    %749 = vmatpush1.msra.mxu0 %v456
    %750 = vmatprep.mubr.f32.mxu0 %v264
    %751 = vmatmul.mubr.f32.gmra.mrb[0].mxu0 %v263
    %v752 = vpop.f32.mrb[0].mxu0
    %v753 = vadd.f32 %v683, %v752
    %v754 = vpop.f32.mrb[0].mxu0
    %755 = vdwg.mxu0
    %v756 = vmax.f32 %v612, 0.0
    %v757 = vmax.f32 %v614, 0.0
    %v758 = vmax.f32 %v753, 0.0
    %v759 = vld [vmem:[#allocation8] sm:$0xff]
    %v760 = vld [vmem:[#allocation8 + $0x8] sm:$0xff]
    %v761 = vld [vmem:[#allocation8 + $0x10] sm:$0xff]
    %v762 = vld [vmem:[#allocation8 + $0x18] sm:$0xff]
    %v763 = vld [vmem:[#allocation8 + $0x20] sm:$0xff]
    %v764 = vld [vmem:[#allocation8 + $0x28] sm:$0xff]
    %v765 = vld [vmem:[#allocation8 + $0x30] sm:$0xff]
    %v766 = vld [vmem:[#allocation8 + $0x38] sm:$0xff]
    %v767 = vld [vmem:[#allocation8 + $0x40] sm:$0xff]
    %v768 = vld [vmem:[#allocation8 + $0x48] sm:$0xff]
    %v769 = vld [vmem:[#allocation8 + $0x50] sm:$0xff]
    %v770 = vld [vmem:[#allocation8 + $0x58] sm:$0xff]
    %v771 = vld [vmem:[#allocation8 + $0x60] sm:$0xff]
    %v772 = vld [vmem:[#allocation8 + $0x68] sm:$0xff]
    %v773 = vld [vmem:[#allocation8 + $0x70] sm:$0xff]
    %v774 = vld [vmem:[#allocation8 + $0x78] sm:$0xff]
    %v775 = vld [vmem:[#allocation8 + $0x80] sm:$0xff]
    %v776 = vld [vmem:[#allocation8 + $0x88] sm:$0xff]
    %v777 = vld [vmem:[#allocation8 + $0x90] sm:$0xff]
    %v778 = vld [vmem:[#allocation8 + $0x98] sm:$0xff]
    %v779 = vld [vmem:[#allocation8 + $0xa0] sm:$0xff]
    %v780 = vld [vmem:[#allocation8 + $0xa8] sm:$0xff]
    %v781 = vld [vmem:[#allocation8 + $0xb0] sm:$0xff]
    %v782 = vld [vmem:[#allocation8 + $0xb8] sm:$0xff]
    %v783 = vld [vmem:[#allocation8 + $0xc0] sm:$0xff]
    %v784 = vld [vmem:[#allocation8 + $0xc8] sm:$0xff]
    %v785 = vld [vmem:[#allocation8 + $0xd0] sm:$0xff]
    %v786 = vld [vmem:[#allocation8 + $0xd8] sm:$0xff]
    %v787 = vld [vmem:[#allocation8 + $0xe0] sm:$0xff]
    %v788 = vld [vmem:[#allocation8 + $0xe8] sm:$0xff]
    %v789 = vld [vmem:[#allocation8 + $0xf0] sm:$0xff]
    %v790 = vld [vmem:[#allocation8 + $0xf8] sm:$0xff]
    %v791 = vld [vmem:[#allocation8 + $0x100] sm:$0xff]
    %v792 = vld [vmem:[#allocation8 + $0x108] sm:$0xff]
    %v793 = vld [vmem:[#allocation8 + $0x110] sm:$0xff]
    %v794 = vld [vmem:[#allocation8 + $0x118] sm:$0xff]
    %v795 = vld [vmem:[#allocation8 + $0x120] sm:$0xff]
    %v796 = vld [vmem:[#allocation8 + $0x128] sm:$0xff]
    %v797 = vld [vmem:[#allocation8 + $0x130] sm:$0xff]
    %v798 = vld [vmem:[#allocation8 + $0x138] sm:$0xff]
    %v799 = vld [vmem:[#allocation8 + $0x140] sm:$0xff]
    %v800 = vld [vmem:[#allocation8 + $0x148] sm:$0xff]
    %v801 = vld [vmem:[#allocation8 + $0x150] sm:$0xff]
    %v802 = vld [vmem:[#allocation8 + $0x158] sm:$0xff]
    %v803 = vld [vmem:[#allocation8 + $0x160] sm:$0xff]
    %v804 = vld [vmem:[#allocation8 + $0x168] sm:$0xff]
    %v805 = vld [vmem:[#allocation8 + $0x170] sm:$0xff]
    %v806 = vld [vmem:[#allocation8 + $0x178] sm:$0xff]
    %v807 = vld [vmem:[%s6] sm:$0x1]
    %v809 = vlaneseq
    %v810 = vshrl.u32 %v809, 7
    %v811 = vsub.s32 0, %v810
    %v812 = vrot.slane %v807, %v811
    %814 = vmatprep.subr.mxu0 0.0
    %815 = vmatpush1.msra.mxu0 %v759
    %816 = vmatprep.subr.mxu0 0.0
    %817 = vmatpush1.msra.mxu0 %v760
    %818 = vmatprep.subr.mxu0 0.0
    %819 = vmatpush1.msra.mxu0 %v761
    %820 = vmatprep.subr.mxu0 0.0
    %821 = vmatpush1.msra.mxu0 %v762
    %822 = vmatprep.subr.mxu0 0.0
    %823 = vmatpush1.msra.mxu0 %v763
    %824 = vmatprep.subr.mxu0 0.0
    %825 = vmatpush1.msra.mxu0 %v764
    %826 = vmatprep.subr.mxu0 0.0
    %827 = vmatpush1.msra.mxu0 %v765
    %828 = vmatprep.subr.mxu0 0.0
    %829 = vmatpush1.msra.mxu0 %v766
    %830 = vmatprep.subr.mxu0 0.0
    %831 = vmatpush1.msra.mxu0 %v767
    %832 = vmatprep.subr.mxu0 0.0
    %833 = vmatpush1.msra.mxu0 %v768
    %834 = vmatprep.subr.mxu0 0.0
    %835 = vmatpush1.msra.mxu0 %v769
    %836 = vmatprep.subr.mxu0 0.0
    %837 = vmatpush1.msra.mxu0 %v770
    %838 = vmatprep.subr.mxu0 0.0
    %839 = vmatpush1.msra.mxu0 %v771
    %840 = vmatprep.subr.mxu0 0.0
    %841 = vmatpush1.msra.mxu0 %v772
    %842 = vmatprep.subr.mxu0 0.0
    %843 = vmatpush1.msra.mxu0 %v773
    %844 = vmatprep.subr.mxu0 0.0
    %845 = vmatpush1.msra.mxu0 %v774
    %846 = vmatprep.subr.mxu0 0.0
    %847 = vmatpush1.msra.mxu0 %v775
    %848 = vmatprep.subr.mxu0 0.0
    %849 = vmatpush1.msra.mxu0 %v776
    %850 = vmatprep.subr.mxu0 0.0
    %851 = vmatpush1.msra.mxu0 %v777
    %852 = vmatprep.subr.mxu0 0.0
    %853 = vmatpush1.msra.mxu0 %v778
    %854 = vmatprep.subr.mxu0 0.0
    %855 = vmatpush1.msra.mxu0 %v779
    %856 = vmatprep.subr.mxu0 0.0
    %857 = vmatpush1.msra.mxu0 %v780
    %858 = vmatprep.subr.mxu0 0.0
    %859 = vmatpush1.msra.mxu0 %v781
    %860 = vmatprep.subr.mxu0 0.0
    %861 = vmatpush1.msra.mxu0 %v782
    %862 = vmatprep.subr.mxu0 0.0
    %863 = vmatpush1.msra.mxu0 %v783
    %864 = vmatprep.subr.mxu0 0.0
    %865 = vmatpush1.msra.mxu0 %v784
    %866 = vmatprep.subr.mxu0 0.0
    %867 = vmatpush1.msra.mxu0 %v785
    %868 = vmatprep.subr.mxu0 0.0
    %869 = vmatpush1.msra.mxu0 %v786
    %870 = vmatprep.subr.mxu0 0.0
    %871 = vmatpush1.msra.mxu0 %v787
    %872 = vmatprep.subr.mxu0 0.0
    %873 = vmatpush1.msra.mxu0 %v788
    %874 = vmatprep.subr.mxu0 0.0
    %875 = vmatpush1.msra.mxu0 %v789
    %876 = vmatprep.subr.mxu0 0.0
    %877 = vmatpush1.msra.mxu0 %v790
    %878 = vmatprep.mubr.f32.mxu0 %v757
    %879 = vmatmul.mubr.f32.gmra.mrb[0].mxu0 %v756
    %v880 = vpop.f32.mrb[0].mxu0
    %v881 = vadd.f32 %v812, %v880
    %v882 = vpop.f32.mrb[0].mxu0
    %883 = vdwg.mxu0
    %884 = vmatprep.subr.mxu0 0.0
    %885 = vmatpush1.msra.mxu0 %v791
    %886 = vmatprep.subr.mxu0 0.0
    %887 = vmatpush1.msra.mxu0 %v792
    %888 = vmatprep.subr.mxu0 0.0
    %889 = vmatpush1.msra.mxu0 %v793
    %890 = vmatprep.subr.mxu0 0.0
    %891 = vmatpush1.msra.mxu0 %v794
    %892 = vmatprep.subr.mxu0 0.0
    %893 = vmatpush1.msra.mxu0 %v795
    %894 = vmatprep.subr.mxu0 0.0
    %895 = vmatpush1.msra.mxu0 %v796
    %896 = vmatprep.subr.mxu0 0.0
    %897 = vmatpush1.msra.mxu0 %v797
    %898 = vmatprep.subr.mxu0 0.0
    %899 = vmatpush1.msra.mxu0 %v798
    %900 = vmatprep.subr.mxu0 0.0
    %901 = vmatpush1.msra.mxu0 %v799
    %902 = vmatprep.subr.mxu0 0.0
    %903 = vmatpush1.msra.mxu0 %v800
    %904 = vmatprep.subr.mxu0 0.0
    %905 = vmatpush1.msra.mxu0 %v801
    %906 = vmatprep.subr.mxu0 0.0
    %907 = vmatpush1.msra.mxu0 %v802
    %908 = vmatprep.subr.mxu0 0.0
    %909 = vmatpush1.msra.mxu0 %v803
    %910 = vmatprep.subr.mxu0 0.0
    %911 = vmatpush1.msra.mxu0 %v804
    %912 = vmatprep.subr.mxu0 0.0
    %913 = vmatpush1.msra.mxu0 %v805
    %914 = vmatprep.subr.mxu0 0.0
    %915 = vmatpush1.msra.mxu0 %v806
    %916 = vmatprep.subr.mxu0 0.0
    %917 = vmatpush1.msra.mxu0 0.0
    %918 = vmatprep.subr.mxu0 0.0
    %919 = vmatpush1.msra.mxu0 0.0
    %920 = vmatprep.subr.mxu0 0.0
    %921 = vmatpush1.msra.mxu0 0.0
    %922 = vmatprep.subr.mxu0 0.0
    %923 = vmatpush1.msra.mxu0 0.0
    %924 = vmatprep.subr.mxu0 0.0
    %925 = vmatpush1.msra.mxu0 0.0
    %926 = vmatprep.subr.mxu0 0.0
    %927 = vmatpush1.msra.mxu0 0.0
    %928 = vmatprep.subr.mxu0 0.0
    %929 = vmatpush1.msra.mxu0 0.0
    %930 = vmatprep.subr.mxu0 0.0
    %931 = vmatpush1.msra.mxu0 0.0
    %932 = vmatprep.subr.mxu0 0.0
    %933 = vmatpush1.msra.mxu0 0.0
    %934 = vmatprep.subr.mxu0 0.0
    %935 = vmatpush1.msra.mxu0 0.0
    %936 = vmatprep.subr.mxu0 0.0
    %937 = vmatpush1.msra.mxu0 0.0
    %938 = vmatprep.subr.mxu0 0.0
    %939 = vmatpush1.msra.mxu0 0.0
    %940 = vmatprep.subr.mxu0 0.0
    %941 = vmatpush1.msra.mxu0 0.0
    %942 = vmatprep.subr.mxu0 0.0
    %943 = vmatpush1.msra.mxu0 0.0
    %944 = vmatprep.subr.mxu0 0.0
    %945 = vmatpush1.msra.mxu0 0.0
    %946 = vmatprep.subr.mxu0 0.0
    %947 = vmatpush1.msra.mxu0 0.0
    %948 = vmatprep.mubr.f32.mxu0 0.0
    %949 = vmatmul.mubr.f32.gmra.mrb[0].mxu0 %v758
    %v950 = vpop.f32.mrb[0].mxu0
    %v951 = vadd.f32 %v881, %v950
    %v952 = vpop.f32.mrb[0].mxu0
    %953 = vdwg.mxu0
    %v954 = vtanh.pop %v951
    %955 = vst [vmem:[#allocation10] sm:$0xff] %v954
    // Predicated region
    $region46: #{tpu_custom_call.1} parent=1 // pred_check
      _
    $region47: #{tpu_custom_call.1} parent=1 // pred_check_branch
      %957 = sbr.rel (0) target = $region49
    $region48: #{tpu_custom_call.1} parent=1 // pred_region
      %s959 = ssub.s32 128, 128
      %960 = vsyncadd [#allocation4], %s959
      %s962 = sshll.u32 [#allocation10], 4
      %s963 = int_to_ptr.vmem [resolvable:$true] %s962
      %965 = dma.vmem_to_hbm [thread:$0]  %s963, 128, %s7, [#allocation4]
    $region49: #{tpu_custom_call.1} parent=1 // pred_fallthru
      _
    // Predicated region
    $region50: #{tpu_custom_call.1} parent=1 // pred_check
      _
    $region51: #{tpu_custom_call.1} parent=1 // pred_check_branch
      %967 = sbr.rel (0) target = $region53
    $region52: #{tpu_custom_call.1} parent=1 // pred_region
      %968 = dma.done [#allocation4], 128
    $region53: #{tpu_custom_call.1} parent=1 // pred_fallthru
      _
    %969 = vsyncpa [#allocation3], 1
    %970 = vsyncpa [#allocation6], 1
    %971 = vsyncpa [#allocation9], 1
    %972 = vsyncpa [#allocation4], 1

</llo_original>
